<compile_context>
chip_gen: v7x
topology: tpu7x:2x2x1
jax: 0.10.0
libtpu: 0.0.40
codegen_flags: <defaults>
</compile_context>

<pallas_src>
import functools
import math

import jax
import jax.numpy as jnp
import numpy as np
from jax.experimental import pallas as pl
from jax.experimental.pallas import tpu as pltpu


DEFAULT_COMPUTE_DTYPE = jnp.bfloat16   # MXU-native; accumulation stays f32.


def _vmem_limit_bytes():
    """Generation-aware scoped-VMEM limit: ~3/4 of physical, capped at 96 MiB."""
    try:
        cap = pltpu.get_tpu_info().vmem_capacity_bytes
    except Exception:
        cap = 64 << 20                      # conservative (v7x physical)
    return int(min(cap * 3 // 4, 96 << 20))


def _tile(dim, preferred, align):
    """Largest multiple of `align` <= preferred dividing dim; else the full dim
    (a full-extent block is always a legal BlockSpec)."""
    if dim <= preferred:
        return dim
    t = preferred - preferred % align
    while t >= align:
        if dim % t == 0:
            return t
        t -= align
    return dim


# --------------------------------------------------------------------------------
# Tiled linear projection:  y = x @ W_t + b      (W_t already (Din, Dout), bf16)
# --------------------------------------------------------------------------------
def _linear_kernel_acc(x_ref, w_ref, b_ref, o_ref, acc_ref, *, cdtype):
    @pl.when(pl.program_id(2) == 0)
    def _init():
        acc_ref[...] = jnp.zeros_like(acc_ref)

    acc_ref[...] += jnp.dot(x_ref[...].astype(cdtype), w_ref[...],
                            preferred_element_type=jnp.float32)

    @pl.when(pl.program_id(2) == pl.num_programs(2) - 1)
    def _finalize():
        o_ref[...] = (acc_ref[...] + b_ref[...]).astype(o_ref.dtype)


def _linear_kernel_noacc(x_ref, w_ref, b_ref, o_ref, *, cdtype):
    acc = jnp.dot(x_ref[...].astype(cdtype), w_ref[...],
                  preferred_element_type=jnp.float32)
    o_ref[...] = (acc + b_ref[...]).astype(o_ref.dtype)


def pallas_linear(x2d, w_t, b, *, out_dtype=None, tm=512, tn=256, tk=512):
    """x2d: (M, Din) any float dtype (cast to the compute dtype in-kernel);
    w_t: (Din, Dout) pre-transposed weight already in the compute dtype (bf16);
    b: (Dout,) f32.  Accumulation is f32 on the MXU."""
    M, Din = x2d.shape
    Dout = w_t.shape[1]
    cdtype = w_t.dtype
    out_dtype = out_dtype or x2d.dtype
    vmem_limit = _vmem_limit_bytes()

    # Weight-resident path: whole weight stays in VMEM -> K/N grids collapse to 1,
    # no f32 accumulator scratch, the weight is DMA'd once (not M/tm times).
    w_bytes = Din * Dout * jnp.dtype(cdtype).itemsize
    if w_bytes <= min(6 << 20, vmem_limit // 6):
        tn, tk = Dout, Din

    tn = _tile(Dout, tn, 128)
    tk = _tile(Din, tk, 128)
    k_grid = Din // tk

    xb = jnp.dtype(x2d.dtype).itemsize
    ob = jnp.dtype(out_dtype).itemsize
    wb = jnp.dtype(cdtype).itemsize
    tm_c = _tile(M, tm, 8)
    for tm_pref in (tm, 256, 128, 64, 32, 16, 8):
        tm_c = _tile(M, tm_pref, 8)
        need = (2 * tm_c * tk * xb + 2 * tk * tn * wb + 2 * tn * 4
                + 2 * tm_c * tn * ob + (tm_c * tn * 4 if k_grid > 1 else 0))
        if need <= vmem_limit - (2 << 20):
            break
    tm = tm_c

    b2d = b.reshape(1, Dout).astype(jnp.float32)
    grid = (M // tm, Dout // tn, k_grid)
    params = pltpu.CompilerParams(
        dimension_semantics=("parallel", "parallel", "arbitrary"),
        vmem_limit_bytes=vmem_limit)

    if k_grid == 1:
        kern = functools.partial(_linear_kernel_noacc, cdtype=cdtype)
        scratch = []
    else:
        kern = functools.partial(_linear_kernel_acc, cdtype=cdtype)
        scratch = [pltpu.VMEM((tm, tn), jnp.float32)]

    return pl.pallas_call(
        kern,
        out_shape=jax.ShapeDtypeStruct((M, Dout), out_dtype),
        grid=grid,
        in_specs=[
            pl.BlockSpec((tm, tk), lambda i, j, k: (i, k)),
            pl.BlockSpec((tk, tn), lambda i, j, k: (k, j)),
            pl.BlockSpec((1, tn), lambda i, j, k: (0, j)),
        ],
        out_specs=pl.BlockSpec((tm, tn), lambda i, j, k: (i, j)),
        scratch_shapes=scratch,
        compiler_params=params,
    )(x2d, w_t, b2d)


# --------------------------------------------------------------------------------
# Attention core: grid = (batch, head_block, q_row_tile); lane-dense (tq, hb*dk).
# --------------------------------------------------------------------------------
def _mha_kernel(q_ref, k_ref, v_ref, bias_ref, o_ref, *, hb, dk, scale):
    """q_ref/o_ref: (tq, hb*dk) bf16; k_ref/v_ref: (S, hb*dk) bf16;
    bias_ref: (tq, S) f32 additive mask (0 / -1e9) — precomputed in the wrapper, so
    the kernel does no compares/selects."""
    bias = bias_ref[...]                       # loaded once, shared by all heads
    outs = []
    for h in range(hb):                        # static unroll over heads in the block
        lo = h * dk
        q = q_ref[:, lo:lo + dk] * scale       # fold 1/sqrt(dk) into q (tq*dk muls)
        k = k_ref[:, lo:lo + dk]
        v = v_ref[:, lo:lo + dk]
        # scores = q @ k^T without materializing a transposed copy of k.
        s = jax.lax.dot_general(q, k, (((1,), (1,)), ((), ())),
                                preferred_element_type=jnp.float32)
        s = s + bias
        s_max = jnp.max(s, axis=-1, keepdims=True)
        p = jnp.exp(s - s_max)                 # unnormalized probabilities
        denom = jnp.sum(p, axis=-1, keepdims=True)
        pv = jax.lax.dot_general(p.astype(v.dtype), v, (((1,), (0,)), ((), ())),
                                 preferred_element_type=jnp.float32)
        # Deferred softmax normalization on the (tq, dk) output (EUP reciprocal).
        outs.append(pv * pl.reciprocal(denom, approx=True))
    # One lane-dense (tq, hb*dk) store instead of hb masked dk-wide column stores.
    o_ref[...] = jnp.concatenate(outs, axis=-1).astype(o_ref.dtype)


def _plan_attention(numheads, dk, S, feat_widths, budget_bytes):
    """Pick (head_block, q_tile).  head_block*dk must be a legal BlockSpec lane
    width for every array width in feat_widths (multiple of 128 or the full width).
    VMEM accounting includes double-buffered q/k/v/out tiles, the f32 additive-mask
    tile and the per-head f32 score/prob intermediates of the unrolled head loop.
    Returns None if no legal head_block exists."""
    legal = [hb for hb in range(numheads, 0, -1)
             if numheads % hb == 0
             and all((hb * dk) % 128 == 0 or hb * dk == w for w in feat_widths)]
    if not legal:
        return None
    tqs = [S] + [t for t in (512, 256, 128, 64, 32, 16, 8) if t < S and S % t == 0]
    for hb in legal:
        bw = hb * dk
        for tq in tqs:
            need = (2 * tq * bw * 2          # q tile (bf16, double-buffered)
                    + 2 * 2 * S * bw * 2     # k + v tiles
                    + 2 * tq * bw * 2        # out tile
                    + 2 * tq * S * 4         # additive-mask tile (f32)
                    + hb * (2 * tq * S * 4 + tq * dk * 4))  # per-head f32 scores/p + pv
            if need <= budget_bytes:
                return hb, tq
    return legal[-1], tqs[-1]


def pallas_attention(q_arr, k_arr, v_arr, bias, *, numheads, d_model, head_block,
                     q_block, col_offsets=(0, 0, 0), out_dtype=None):
    """q/k/v arrays: (B, S, W) with each tensor's D feature columns starting at
    element offset col_offsets[i] (multiples of head_block*dk -> fused QKV buffer
    can be read directly).  bias: (1 or B, S, S) additive mask.
    Returns (B, S, d_model) in the head-merged layout (ready for the wo matmul)."""
    B, S = q_arr.shape[0], q_arr.shape[1]
    dk = d_model // numheads
    hb = head_block
    nb = numheads // hb
    bw = hb * dk
    tq = q_block
    nq = S // tq
    scale = 1.0 / math.sqrt(dk)
    mB = bias.shape[0]
    out_dtype = out_dtype or q_arr.dtype
    vmem_limit = _vmem_limit_bytes()

    kern = functools.partial(_mha_kernel, hb=hb, dk=dk, scale=scale)

    def q_spec(off_elems):
        off_blk = off_elems // bw
        return pl.BlockSpec((None, tq, bw),
                            lambda b, g, qi, o=off_blk: (b, qi, g + o))

    def kv_spec(off_elems):
        off_blk = off_elems // bw
        # Depends only on (b, g): the innermost q axis revisits the block (no re-DMA).
        return pl.BlockSpec((None, S, bw),
                            lambda b, g, qi, o=off_blk: (b, 0, g + o))

    bias_spec = pl.BlockSpec((None, tq, S),
                             lambda b, g, qi, mb=mB: (b if mb > 1 else 0, qi, 0))

    return pl.pallas_call(
        kern,
        out_shape=jax.ShapeDtypeStruct((B, S, d_model), out_dtype),
        grid=(B, nb, nq),
        in_specs=[q_spec(col_offsets[0]),
                  kv_spec(col_offsets[1]),
                  kv_spec(col_offsets[2]),
                  bias_spec],
        out_specs=pl.BlockSpec((None, tq, bw), lambda b, g, qi: (b, qi, g)),
        compiler_params=pltpu.CompilerParams(
            dimension_semantics=("parallel", "parallel", "parallel"),
            vmem_limit_bytes=vmem_limit),
    )(q_arr, k_arr, v_arr, bias)


# --------------------------------------------------------------------------------
# Module wrapper
# --------------------------------------------------------------------------------
class MultiHeadAttentionBlockPallas:
    def __init__(self, dModel: int, numheads: int, dropout: float, key,
                 compute_dtype=DEFAULT_COMPUTE_DTYPE):
        assert dModel % numheads == 0, "dModel is not divisible by numheads"
        self.dModel = dModel
        self.numheads = numheads
        self.dk = dModel // numheads
        self.dropout = dropout  # TODO(synk): dropout not applied (eval / p = 0)
        self.compute_dtype = compute_dtype

        ks = jax.random.split(key, 8)
        bound = 1.0 / math.sqrt(dModel)

        def lin(kw, kb):
            # Stored directly in (Din, Dout) layout -> no per-call transpose.
            w_t = jax.random.uniform(kw, (dModel, dModel), jnp.float32, -bound, bound)
            b = jax.random.uniform(kb, (dModel,), jnp.float32, -bound, bound)
            return w_t, b

        # f32 master copies (reference numerics) + bf16 compute copies for the MXU.
        self.wq_t, self.bq = lin(ks[0], ks[1])
        self.wk_t, self.bk = lin(ks[2], ks[3])
        self.wv_t, self.bv = lin(ks[4], ks[5])
        self.wo_t, self.bo = lin(ks[6], ks[7])

        cd = compute_dtype
        self.wq_c = self.wq_t.astype(cd)
        self.wk_c = self.wk_t.astype(cd)
        self.wv_c = self.wv_t.astype(cd)
        self.wo_c = self.wo_t.astype(cd)
        # Fused QKV weight, built once: (D, 3D) bf16 / (3D,) f32.
        self.w_qkv_c = jnp.concatenate([self.wq_c, self.wk_c, self.wv_c], axis=1)
        self.b_qkv = jnp.concatenate([self.bq, self.bk, self.bv])

    def __call__(self, q, k, v, mask=None, *, fuse_qkv=None):
        B, S, D = q.shape
        H, dk = self.numheads, self.dk
        cd = self.compute_dtype
        assert k.shape[1] == S and v.shape[1] == S, \
            "TODO(synk): q and k/v must share a sequence length in this kernel"

        # Pad the sequence to a sublane multiple so every block stays (8,128)-legal
        # and M-tiling of the linears survives real ViT lengths (e.g. S=197).
        S_pad = ((S + 7) // 8) * 8

        def pad_seq(x):
            return x if S_pad == S else jnp.pad(x, ((0, 0), (0, S_pad - S), (0, 0)))

        if mask is None:
            mask_i = jnp.ones((1, 1, S, S), jnp.int32)
        else:
            assert mask.shape[1] == 1, "mask must broadcast over heads"
            mask_i = mask.astype(jnp.int32)
        if S_pad != S:
            # Padded key columns are masked out (pad value 0).
            mask_i = jnp.pad(mask_i, ((0, 0), (0, 0), (0, S_pad - S), (0, S_pad - S)))
        mB = mask_i.shape[0]
        # Additive mask bias precomputed once: no compares/selects in the kernel.
        bias = jnp.where(mask_i == 0, jnp.float32(-1e9), jnp.float32(0.0))
        bias = bias.reshape(mB, S_pad, S_pad)

        qp, kp, vp = pad_seq(q), pad_seq(k), pad_seq(v)
        M = B * S_pad
        budget = _vmem_limit_bytes() - (4 << 20)

        if fuse_qkv is None:
            fuse_qkv = (q is k) and (k is v)   # self-attention fast path

        if fuse_qkv:
            # One fused projection: (B*S, D) @ (D, 3D) -> bf16.
            qkv = pallas_linear(qp.reshape(M, D), self.w_qkv_c, self.b_qkv, out_dtype=cd)
            qkv = qkv.reshape(B, S_pad, 3 * D)
            plan = _plan_attention(H, dk, S_pad, (3 * D, 3 * D, 3 * D, D), budget)
            if plan is not None:
                hb, tq = plan
                # Attention reads q/k/v straight out of the fused buffer via
                # column-offset index maps (zero wrapper-side slicing).
                x = pallas_attention(qkv, qkv, qkv, bias, numheads=H, d_model=D,
                                     head_block=hb, q_block=tq,
                                     col_offsets=(0, D, 2 * D), out_dtype=cd)
            else:
                # D not 128-aligned: fall back to slicing the fused buffer.
                qh, kh, vh = qkv[:, :, :D], qkv[:, :, D:2 * D], qkv[:, :, 2 * D:]
                hb, tq = _plan_attention(H, dk, S_pad, (D, D, D, D), budget)
                x = pallas_attention(qh, kh, vh, bias, numheads=H, d_model=D,
                                     head_block=hb, q_block=tq, out_dtype=cd)
        else:
            qh = pallas_linear(qp.reshape(M, D), self.wq_c, self.bq,
                               out_dtype=cd).reshape(B, S_pad, D)
            kh = pallas_linear(kp.reshape(M, D), self.wk_c, self.bk,
                               out_dtype=cd).reshape(B, S_pad, D)
            vh = pallas_linear(vp.reshape(M, D), self.wv_c, self.bv,
                               out_dtype=cd).reshape(B, S_pad, D)
            hb, tq = _plan_attention(H, dk, S_pad, (D, D, D, D), budget)
            x = pallas_attention(qh, kh, vh, bias, numheads=H, d_model=D,
                                 head_block=hb, q_block=tq, out_dtype=cd)

        # x is already (B, S_pad, H*dk) bf16 -> output projection back to f32.
        out = pallas_linear(x.reshape(M, D), self.wo_c, self.bo,
                            out_dtype=q.dtype).reshape(B, S_pad, D)
        return out[:, :S, :] if S_pad != S else out


# --------------------------------------------------------------------------------
# Pure-JAX f32 reference (mirrors the PyTorch forward)
# --------------------------------------------------------------------------------
def reference_forward(mod, q, k, v, mask):
    B, S, D = q.shape
    H, dk = mod.numheads, mod.dk
    query = q @ mod.wq_t + mod.bq
    key_ = k @ mod.wk_t + mod.bk
    value = v @ mod.wv_t + mod.bv
    qh = query.reshape(B, S, H, dk).transpose(0, 2, 1, 3)
    kh = key_.reshape(B, S, H, dk).transpose(0, 2, 1, 3)
    vh = value.reshape(B, S, H, dk).transpose(0, 2, 1, 3)
    scores = (qh @ kh.transpose(0, 1, 3, 2)) / math.sqrt(dk)
    if mask is not None:
        scores = jnp.where(mask == 0, -1e9, scores)
    scores = jax.nn.softmax(scores, axis=-1)
    xh = scores @ vh
    x = xh.transpose(0, 2, 1, 3).reshape(B, S, D)
    return x @ mod.wo_t + mod.bo


if __name__ == "__main__":
    # Small but lane-dense shapes: dModel = 128 (numheads=4, dk=32) keeps every
    # BlockSpec 128-aligned and exercises the fused-QKV column-offset path.
    B, S, D, H = 2, 8, 128, 4
    root = jax.random.PRNGKey(0)
    k_x, k_q, k_k, k_v, k_params = jax.random.split(root, 5)

    mod = MultiHeadAttentionBlockPallas(dModel=D, numheads=H, dropout=0.0, key=k_params)
    # Causal mask, broadcast over batch and heads (like torch masked_fill_).
    mask = jnp.tril(jnp.ones((S, S), jnp.int32)).reshape(1, 1, S, S)

    # Tolerance covers bf16 matmul inputs (f32 accumulation) plus the approximate
    # (EUP) softmax reciprocal, compared against a pure-f32 reference.
    rtol = atol = 3e-2

    # 1) Self-attention -> fused QKV projection + column-offset attention path.
    x = jax.random.normal(k_x, (B, S, D), jnp.float32)
    out_self = jax.block_until_ready(mod(x, x, x, mask))
    ref_self = reference_forward(mod, x, x, x, mask)
    np.testing.assert_allclose(np.asarray(out_self, np.float32), np.asarray(ref_self),
                               rtol=rtol, atol=atol)

    # 2) Cross-attention (distinct q/k/v) -> separate projection path.
    q_in = jax.random.normal(k_q, (B, S, D), jnp.float32)
    k_in = jax.random.normal(k_k, (B, S, D), jnp.float32)
    v_in = jax.random.normal(k_v, (B, S, D), jnp.float32)
    out_cross = jax.block_until_ready(mod(q_in, k_in, v_in, mask))
    ref_cross = reference_forward(mod, q_in, k_in, v_in, mask)
    np.testing.assert_allclose(np.asarray(out_cross, np.float32), np.asarray(ref_cross),
                               rtol=rtol, atol=atol)

    print("KERNEL_OK")
</pallas_src>

<mosaic_0001>
module attributes {stable_mosaic.version = 11 : i64} {
  func.func @_linear_kernel_noacc(%arg0: i32, %arg1: i32, %arg2: i32, %arg3: memref<16x128xf32, #tpu.memory_space<vmem>>, %arg4: memref<128x384xbf16, #tpu.memory_space<vmem>>, %arg5: memref<1x384xf32, #tpu.memory_space<vmem>>, %arg6: memref<16x384xbf16, #tpu.memory_space<vmem>>) attributes {dimension_semantics = [#tpu.dimension_semantics<parallel>, #tpu.dimension_semantics<parallel>, #tpu.dimension_semantics<arbitrary>], iteration_bounds = array<i64: 1, 1, 1>, scalar_prefetch = 0 : i64, scratch_operands = 0 : i64, tpu.core_type = #tpu.core_type<tc>, window_params = [{transform_indices = @transform_0, window_bounds = array<i64: 16, 128>}, {transform_indices = @transform_1, window_bounds = array<i64: 128, 384>}, {transform_indices = @transform_2, window_bounds = array<i64: 1, 384>}, {transform_indices = @transform_3, window_bounds = array<i64: 16, 384>}]} {
    %c0 = arith.constant 0 : index
    %c0_0 = arith.constant 0 : index
    %0 = vector.load %arg3[%c0, %c0_0] : memref<16x128xf32, #tpu.memory_space<vmem>>, vector<16x128xf32>
    %1 = arith.truncf %0 : vector<16x128xf32> to vector<16x128xbf16>
    %c0_1 = arith.constant 0 : index
    %c0_2 = arith.constant 0 : index
    %2 = vector.load %arg4[%c0_1, %c0_2] : memref<128x384xbf16, #tpu.memory_space<vmem>>, vector<128x384xbf16>
    %cst = arith.constant dense<0.000000e+00> : vector<16x384xf32>
    %3 = tpu.matmul %1, %2, %cst {dimension_numbers = #tpu.dot_dimension_numbers<[1], [0], [0], [1], [0, 0, 1, 1], [], []>} : vector<16x128xbf16>, vector<128x384xbf16>, vector<16x384xf32> -> vector<16x384xf32>
    %c0_3 = arith.constant 0 : index
    %c0_4 = arith.constant 0 : index
    %4 = vector.load %arg5[%c0_3, %c0_4] : memref<1x384xf32, #tpu.memory_space<vmem>>, vector<1x384xf32>
    %5 = vector.broadcast %4 : vector<1x384xf32> to vector<16x384xf32>
    %6 = arith.addf %3, %5 : vector<16x384xf32>
    %7 = arith.truncf %6 : vector<16x384xf32> to vector<16x384xbf16>
    %c0_5 = arith.constant 0 : index
    %c0_6 = arith.constant 0 : index
    %8 = vector.load %arg6[%c0_5, %c0_6] : memref<16x384xbf16, #tpu.memory_space<vmem>>, vector<16x384xbf16>
    tpu.vector_store %arg6[%c0_5, %c0_6], %7 {strides = array<i32>} : memref<16x384xbf16, #tpu.memory_space<vmem>>, vector<16x384xbf16>,
    return
  }
  func.func @transform_0(%arg0: i32, %arg1: i32, %arg2: i32) -> (i32, i32) {
    %c0_i32 = arith.constant 0 : i32
    return %arg0, %arg2 : i32, i32
  }
  func.func @transform_1(%arg0: i32, %arg1: i32, %arg2: i32) -> (i32, i32) {
    %c0_i32 = arith.constant 0 : i32
    return %arg2, %arg1 : i32, i32
  }
  func.func @transform_2(%arg0: i32, %arg1: i32, %arg2: i32) -> (i32, i32) {
    %c0_i32 = arith.constant 0 : i32
    %c0_i32_0 = arith.constant 0 : i32
    return %c0_i32, %arg1 : i32, i32
  }
  func.func @transform_3(%arg0: i32, %arg1: i32, %arg2: i32) -> (i32, i32) {
    %c0_i32 = arith.constant 0 : i32
    return %arg0, %arg1 : i32, i32
  }
}

</mosaic_0001>

<llo_original>
// kernel: tpu_custom_call.1
$region0: #{tpu_custom_call.1}
  #allocation0 [shape = 'u32[]', space=smem, size = 0x4, offset = 0x4, fixed_abs, tag = 'smem constant byte address 0x4 - core index']
  #allocation1 [shape = 'u32[144,128]{1,0:T(1,128)}', space=vmem, size = 0x12000, scoped, tag = 'internal scratch']
  %s0 = inlined_call_operand.hbm [shape: f32[16,128], index: 0, kind: input, shape index: {}]
  %s1 = inlined_call_operand.hbm [shape: bf16[128,384], index: 1, kind: input, shape index: {}]
  %s2 = inlined_call_operand.vmem [shape: f32[1,384], index: 2, kind: input, shape index: {}]
  %s3 = inlined_call_operand.hbm [shape: bf16[16,384], index: 3, kind: output, shape index: {}]
  %s4 = sld [smem:[#allocation0]]
  $region30: #{tpu_custom_call.1} parent=0
    _
  %s6 = ssub.s32 1, %s4
  %s7 = scalar_select 0, %s6, %s4
  $region1: #{tpu_custom_call.1} parent=0
    #allocation2 [shape = 'u8[8192]{0}', space=vmem, size = 0x2000, scoped, tag = 'input window, operand 0, single buffered']
    #allocation3 [shape = 's32[1]{0}', space=sflag, size = 0x4, scoped, tag = 'scoped memory for tpu_custom_call.1']
    #allocation4 [shape = 's32[1]{0}', space=sflag, size = 0x4, scoped, tag = 'scoped memory for tpu_custom_call.1']
    #allocation5 [shape = 'u8[98304]{0}', space=vmem, size = 0x18000, scoped, tag = 'input window, operand 1, single buffered']
    #allocation6 [shape = 's32[1]{0}', space=sflag, size = 0x4, scoped, tag = 'scoped memory for tpu_custom_call.1']
    #allocation7 [shape = 'u8[12288]{0}', space=vmem, size = 0x3000, scoped, tag = 'output window, operand 0, single buffered']
    %8 = vsyncpa [#allocation3], 0
    %9 = vsyncpa [#allocation6], 0
    %10 = vsyncpa [#allocation4], 0
    // Predicated region
    $region2: #{tpu_custom_call.1} parent=1 // pred_check
      _
    $region3: #{tpu_custom_call.1} parent=1 // pred_check_branch
      %12 = sbr.rel (0) target = $region5
    $region4: #{tpu_custom_call.1} parent=1 // pred_region
      %s14 = ssub.s32 256, 256
      %15 = vsyncadd [#allocation3], %s14
      %s16 = sshll.u32 [#allocation2], 4
      %s17 = int_to_ptr.vmem [resolvable:$true] %s16
      %22 = dma.hbm_to_vmem [thread:$0]  %s0, 256, %s17, [#allocation3], 128, 128, 8
    $region5: #{tpu_custom_call.1} parent=1 // pred_fallthru
      _
    // Predicated region
    $region6: #{tpu_custom_call.1} parent=1 // pred_check
      _
    $region7: #{tpu_custom_call.1} parent=1 // pred_check_branch
      %24 = sbr.rel (0) target = $region9
    $region8: #{tpu_custom_call.1} parent=1 // pred_region
      %s26 = ssub.s32 3072, 3072
      %27 = vsyncadd [#allocation6], %s26
      %s28 = sshll.u32 [#allocation5], 4
      %s29 = int_to_ptr.vmem [resolvable:$true] %s28
      %34 = dma.hbm_to_vmem [thread:$0]  %s1, 3072, %s29, [#allocation6], 192, 192, 12
    $region9: #{tpu_custom_call.1} parent=1 // pred_fallthru
      _
    // Predicated region
    $region10: #{tpu_custom_call.1} parent=1 // pred_check
      _
    $region11: #{tpu_custom_call.1} parent=1 // pred_check_branch
      %36 = sbr.rel (0) target = $region13
    $region12: #{tpu_custom_call.1} parent=1 // pred_region
      _
    $region13: #{tpu_custom_call.1} parent=1 // pred_fallthru
      _
    // Predicated region
    $region14: #{tpu_custom_call.1} parent=1 // pred_check
      _
    $region15: #{tpu_custom_call.1} parent=1 // pred_check_branch
      %38 = sbr.rel (0) target = $region17
    $region16: #{tpu_custom_call.1} parent=1 // pred_region
      %39 = dma.done [#allocation3], 256
    $region17: #{tpu_custom_call.1} parent=1 // pred_fallthru
      _
    // Predicated region
    $region18: #{tpu_custom_call.1} parent=1 // pred_check
      _
    $region19: #{tpu_custom_call.1} parent=1 // pred_check_branch
      %41 = sbr.rel (0) target = $region21
    $region20: #{tpu_custom_call.1} parent=1 // pred_region
      %42 = dma.done [#allocation6], 3072
    $region21: #{tpu_custom_call.1} parent=1 // pred_fallthru
      _
    %v44 = vld [vmem:[#allocation2] sm:$0xff]
    %v45 = vld [vmem:[#allocation2 + $0x8] sm:$0xff]
    %v46 = vpack.c.bf16 %v45, %v44
    %v47 = vld [vmem:[#allocation5] sm:$0xff]
    %v48 = vld [vmem:[#allocation5 + $0x8] sm:$0xf]
    %v49 = vld [vmem:[#allocation5 + $0xc] sm:$0xff]
    %v50 = vld [vmem:[#allocation5 + $0x14] sm:$0xf]
    %v51 = vld [vmem:[#allocation5 + $0x18] sm:$0xff]
    %v52 = vld [vmem:[#allocation5 + $0x20] sm:$0xf]
    %v53 = vld [vmem:[#allocation5 + $0x24] sm:$0xff]
    %v54 = vld [vmem:[#allocation5 + $0x2c] sm:$0xf]
    %v55 = vld [vmem:[#allocation5 + $0x30] sm:$0xff]
    %v56 = vld [vmem:[#allocation5 + $0x38] sm:$0xf]
    %v57 = vld [vmem:[#allocation5 + $0x3c] sm:$0xff]
    %v58 = vld [vmem:[#allocation5 + $0x44] sm:$0xf]
    %v59 = vld [vmem:[#allocation5 + $0x48] sm:$0xff]
    %v60 = vld [vmem:[#allocation5 + $0x50] sm:$0xf]
    %v61 = vld [vmem:[#allocation5 + $0x54] sm:$0xff]
    %v62 = vld [vmem:[#allocation5 + $0x5c] sm:$0xf]
    %v63 = vld [vmem:[#allocation5 + $0x60] sm:$0xff]
    %v64 = vld [vmem:[#allocation5 + $0x68] sm:$0xf]
    %v65 = vld [vmem:[#allocation5 + $0x6c] sm:$0xff]
    %v66 = vld [vmem:[#allocation5 + $0x74] sm:$0xf]
    %v67 = vld [vmem:[#allocation5 + $0x78] sm:$0xff]
    %v68 = vld [vmem:[#allocation5 + $0x80] sm:$0xf]
    %v69 = vld [vmem:[#allocation5 + $0x84] sm:$0xff]
    %v70 = vld [vmem:[#allocation5 + $0x8c] sm:$0xf]
    %v71 = vld [vmem:[#allocation5 + $0x90] sm:$0xff]
    %v72 = vld [vmem:[#allocation5 + $0x98] sm:$0xf]
    %v73 = vld [vmem:[#allocation5 + $0x9c] sm:$0xff]
    %v74 = vld [vmem:[#allocation5 + $0xa4] sm:$0xf]
    %v75 = vld [vmem:[#allocation5 + $0xa8] sm:$0xff]
    %v76 = vld [vmem:[#allocation5 + $0xb0] sm:$0xf]
    %v77 = vld [vmem:[#allocation5 + $0xb4] sm:$0xff]
    %v78 = vld [vmem:[#allocation5 + $0xbc] sm:$0xf]
    %v79 = vld [vmem:[%s2] sm:$0x7]
    %v81 = vlaneseq
    %v82 = vshrl.u32 %v81, 7
    %v83 = vsub.s32 0, %v82
    %v84 = vrot.slane %v79, %v83
    %v85 = vlaneseq
    %v86 = vshrl.u32 %v85, 7
    %v87 = vsub.s32 1, %v86
    %v88 = vrot.slane %v79, %v87
    %v89 = vlaneseq
    %v90 = vshrl.u32 %v89, 7
    %v91 = vsub.s32 2, %v90
    %v92 = vrot.slane %v79, %v91
    %v128 = vunpack.c.l.b16 %v47
    %v129 = vunpack.c.h.b16 %v47
    %v130 = vunpack.c.l.b16 %v48
    %v131 = vunpack.c.l.b16 %v49
    %v132 = vunpack.c.h.b16 %v49
    %v133 = vunpack.c.l.b16 %v50
    %v134 = vunpack.c.l.b16 %v51
    %v135 = vunpack.c.h.b16 %v51
    %v136 = vunpack.c.l.b16 %v52
    %v137 = vunpack.c.l.b16 %v53
    %v138 = vunpack.c.h.b16 %v53
    %v139 = vunpack.c.l.b16 %v54
    %v140 = vunpack.c.l.b16 %v55
    %v141 = vunpack.c.h.b16 %v55
    %v142 = vunpack.c.l.b16 %v56
    %v143 = vunpack.c.l.b16 %v57
    %v144 = vunpack.c.h.b16 %v57
    %v145 = vunpack.c.l.b16 %v58
    %v146 = vunpack.c.l.b16 %v59
    %v147 = vunpack.c.h.b16 %v59
    %v148 = vunpack.c.l.b16 %v60
    %v149 = vunpack.c.l.b16 %v61
    %v150 = vunpack.c.h.b16 %v61
    %v151 = vunpack.c.l.b16 %v62
    %v152 = vunpack.c.l.b16 %v63
    %v153 = vunpack.c.h.b16 %v63
    %v154 = vunpack.c.l.b16 %v64
    %v155 = vunpack.c.l.b16 %v65
    %v156 = vunpack.c.h.b16 %v65
    %v157 = vunpack.c.l.b16 %v66
    %v158 = vunpack.c.l.b16 %v67
    %v159 = vunpack.c.h.b16 %v67
    %v160 = vunpack.c.l.b16 %v68
    %v161 = vunpack.c.l.b16 %v69
    %v162 = vunpack.c.h.b16 %v69
    %v163 = vunpack.c.l.b16 %v70
    %v164 = vunpack.c.l.b16 %v71
    %v165 = vunpack.c.h.b16 %v71
    %v166 = vunpack.c.l.b16 %v72
    %v167 = vunpack.c.l.b16 %v73
    %v168 = vunpack.c.h.b16 %v73
    %v169 = vunpack.c.l.b16 %v74
    %v170 = vunpack.c.l.b16 %v75
    %v171 = vunpack.c.h.b16 %v75
    %v172 = vunpack.c.l.b16 %v76
    %v173 = vunpack.c.l.b16 %v77
    %v174 = vunpack.c.h.b16 %v77
    %v175 = vunpack.c.l.b16 %v78
    %v176 = vpack.c.b16 %v131, %v128
    %v177 = vpack.c.b16 %v132, %v129
    %v178 = vpack.c.b16 %v133, %v130
    %v179 = vpack.c.b16 %v137, %v134
    %v180 = vpack.c.b16 %v138, %v135
    %v181 = vpack.c.b16 %v139, %v136
    %v182 = vpack.c.b16 %v143, %v140
    %v183 = vpack.c.b16 %v144, %v141
    %v184 = vpack.c.b16 %v145, %v142
    %v185 = vpack.c.b16 %v149, %v146
    %v186 = vpack.c.b16 %v150, %v147
    %v187 = vpack.c.b16 %v151, %v148
    %v188 = vpack.c.b16 %v155, %v152
    %v189 = vpack.c.b16 %v156, %v153
    %v190 = vpack.c.b16 %v157, %v154
    %v191 = vpack.c.b16 %v161, %v158
    %v192 = vpack.c.b16 %v162, %v159
    %v193 = vpack.c.b16 %v163, %v160
    %v194 = vpack.c.b16 %v167, %v164
    %v195 = vpack.c.b16 %v168, %v165
    %v196 = vpack.c.b16 %v169, %v166
    %v197 = vpack.c.b16 %v173, %v170
    %v198 = vpack.c.b16 %v174, %v171
    %v199 = vpack.c.b16 %v175, %v172
    %224 = vmatprep.subr.bf16.mxu0 %v177
    %225 = vmatpush1.bf16.msra.mxu0 %v176
    %226 = vmatprep.subr.bf16.mxu0 %v180
    %227 = vmatpush1.bf16.msra.mxu0 %v179
    %228 = vmatprep.subr.bf16.mxu0 %v183
    %229 = vmatpush1.bf16.msra.mxu0 %v182
    %230 = vmatprep.subr.bf16.mxu0 %v186
    %231 = vmatpush1.bf16.msra.mxu0 %v185
    %232 = vmatprep.subr.bf16.mxu0 %v189
    %233 = vmatpush1.bf16.msra.mxu0 %v188
    %234 = vmatprep.subr.bf16.mxu0 %v192
    %235 = vmatpush1.bf16.msra.mxu0 %v191
    %236 = vmatprep.subr.bf16.mxu0 %v195
    %237 = vmatpush1.bf16.msra.mxu0 %v194
    %238 = vmatprep.subr.bf16.mxu0 %v198
    %239 = vmatpush1.bf16.msra.mxu0 %v197
    %240 = vmatprep.subr.bf16.mxu0 0
    %241 = vmatpush1.bf16.msra.mxu0 0
    %242 = vmatprep.subr.bf16.mxu0 0
    %243 = vmatpush1.bf16.msra.mxu0 0
    %244 = vmatprep.subr.bf16.mxu0 0
    %245 = vmatpush1.bf16.msra.mxu0 0
    %246 = vmatprep.subr.bf16.mxu0 0
    %247 = vmatpush1.bf16.msra.mxu0 0
    %248 = vmatprep.subr.bf16.mxu0 0
    %249 = vmatpush1.bf16.msra.mxu0 0
    %250 = vmatprep.subr.bf16.mxu0 0
    %251 = vmatpush1.bf16.msra.mxu0 0
    %252 = vmatprep.subr.bf16.mxu0 0
    %253 = vmatpush1.bf16.msra.mxu0 0
    %254 = vmatprep.subr.bf16.mxu0 0
    %255 = vmatpush1.bf16.msra.mxu0 0
    %256 = vmatprep.mubr.bf16.mxu0 0
    %257 = vmatmul.mubr.bf16.gmra.mrb[0].mxu0 %v46
    %v258 = vpop.f32.mrb[0].mxu0
    %v259 = vadd.f32 %v84, %v258
    %v260 = vpop.f32.mrb[0].mxu0
    %v261 = vadd.f32 %v88, %v260
    %v262 = vpop.f32.mrb[0].mxu0
    %v263 = vadd.f32 %v84, %v262
    %v264 = vpop.f32.mrb[0].mxu0
    %v265 = vadd.f32 %v88, %v264
    %266 = vdwg.mxu0
    %267 = vmatprep.subr.bf16.mxu0 0
    %268 = vmatpush1.bf16.msra.mxu0 %v178
    %269 = vmatprep.subr.bf16.mxu0 0
    %270 = vmatpush1.bf16.msra.mxu0 %v181
    %271 = vmatprep.subr.bf16.mxu0 0
    %272 = vmatpush1.bf16.msra.mxu0 %v184
    %273 = vmatprep.subr.bf16.mxu0 0
    %274 = vmatpush1.bf16.msra.mxu0 %v187
    %275 = vmatprep.subr.bf16.mxu0 0
    %276 = vmatpush1.bf16.msra.mxu0 %v190
    %277 = vmatprep.subr.bf16.mxu0 0
    %278 = vmatpush1.bf16.msra.mxu0 %v193
    %279 = vmatprep.subr.bf16.mxu0 0
    %280 = vmatpush1.bf16.msra.mxu0 %v196
    %281 = vmatprep.subr.bf16.mxu0 0
    %282 = vmatpush1.bf16.msra.mxu0 %v199
    %283 = vmatprep.subr.bf16.mxu0 0
    %284 = vmatpush1.bf16.msra.mxu0 0
    %285 = vmatprep.subr.bf16.mxu0 0
    %286 = vmatpush1.bf16.msra.mxu0 0
    %287 = vmatprep.subr.bf16.mxu0 0
    %288 = vmatpush1.bf16.msra.mxu0 0
    %289 = vmatprep.subr.bf16.mxu0 0
    %290 = vmatpush1.bf16.msra.mxu0 0
    %291 = vmatprep.subr.bf16.mxu0 0
    %292 = vmatpush1.bf16.msra.mxu0 0
    %293 = vmatprep.subr.bf16.mxu0 0
    %294 = vmatpush1.bf16.msra.mxu0 0
    %295 = vmatprep.subr.bf16.mxu0 0
    %296 = vmatpush1.bf16.msra.mxu0 0
    %297 = vmatprep.subr.bf16.mxu0 0
    %298 = vmatpush1.bf16.msra.mxu0 0
    %299 = vmatprep.mubr.bf16.mxu0 0
    %300 = vmatmul.mubr.bf16.gmra.mrb[0].mxu0 %v46
    %v301 = vpop.f32.mrb[0].mxu0
    %v302 = vadd.f32 %v92, %v301
    %v303 = vpop.f32.mrb[0].mxu0
    %v304 = vpop.f32.mrb[0].mxu0
    %v305 = vadd.f32 %v92, %v304
    %v306 = vpop.f32.mrb[0].mxu0
    %307 = vdwg.mxu0
    %v308 = vpack.c.bf16 %v263, %v259
    %v309 = vpack.c.bf16 %v265, %v261
    %v310 = vpack.c.bf16 %v305, %v302
    %v314 = vunpack.c.l.b16 %v308
    %v315 = vunpack.c.l.b16 %v309
    %v316 = vunpack.c.l.b16 %v310
    %v317 = vunpack.c.h.b16 %v308
    %v318 = vunpack.c.h.b16 %v309
    %v319 = vunpack.c.h.b16 %v310
    %v320 = vpack.c.b16 %v315, %v314
    %v321 = vpack.c.b16 %v316, %v316
    %v322 = vpack.c.b16 %v318, %v317
    %v323 = vpack.c.b16 %v319, %v319
    %328 = vst [vmem:[#allocation7] sm:$0xff] %v320
    %329 = vst [vmem:[#allocation7 + $0x8] sm:$0xf] %v321
    %330 = vst [vmem:[#allocation7 + $0xc] sm:$0xff] %v322
    %331 = vst [vmem:[#allocation7 + $0x14] sm:$0xf] %v323
    // Predicated region
    $region22: #{tpu_custom_call.1} parent=1 // pred_check
      _
    $region23: #{tpu_custom_call.1} parent=1 // pred_check_branch
      %333 = sbr.rel (0) target = $region25
    $region24: #{tpu_custom_call.1} parent=1 // pred_region
      %s335 = ssub.s32 384, 384
      %336 = vsyncadd [#allocation4], %s335
      %s337 = sshll.u32 [#allocation7], 4
      %s338 = int_to_ptr.vmem [resolvable:$true] %s337
      %343 = dma.vmem_to_hbm [thread:$0]  %s338, 384, %s3, [#allocation4], 192, 192, 12
    $region25: #{tpu_custom_call.1} parent=1 // pred_fallthru
      _
    // Predicated region
    $region26: #{tpu_custom_call.1} parent=1 // pred_check
      _
    $region27: #{tpu_custom_call.1} parent=1 // pred_check_branch
      %345 = sbr.rel (0) target = $region29
    $region28: #{tpu_custom_call.1} parent=1 // pred_region
      %346 = dma.done [#allocation4], 384
    $region29: #{tpu_custom_call.1} parent=1 // pred_fallthru
      _
    %347 = vsyncpa [#allocation3], 1
    %348 = vsyncpa [#allocation6], 1
    %349 = vsyncpa [#allocation4], 1

</llo_original>
